<compile_context>
chip_gen: v6e
topology: v6e:2x2x1
jax: 0.10.0
libtpu: 0.0.40
codegen_flags: <defaults>
</compile_context>

<pallas_src>
import jax
import jax.numpy as jnp
from jax.experimental import pallas as pl
from jax.experimental.pallas import tpu as pltpu


# ---------------------------------------------------------------------------
# Kernel
# ---------------------------------------------------------------------------
def _make_attention_kernel(s_actual, s_pad):
    """Build the kernel with static sequence sizes closed over."""

    def kernel(x_ref, w1_ref, b1_ref, w2_ref, o_ref):
        Bt, _, F = x_ref.shape
        H = w1_ref.shape[1]

        x = x_ref[...]                                    # (Bt, S_pad, F)

        # ---- Linear(F->H) + Tanh ------------------------------------------
        # Merge (Bt, S_pad) so the MXU sees M = Bt*S_pad.  S_pad is a multiple
        # of the sublane tile of x.dtype, so this reshape is layout-preserving
        # (no VMEM relayout copy).
        x2 = x.reshape(Bt * s_pad, F)
        h2 = jnp.tanh(
            jnp.dot(x2, w1_ref[...], preferred_element_type=jnp.float32)
            + b1_ref[...]                                 # (1, H) f32 broadcast
        )                                                 # (Bt*S_pad, H) f32
        h = h2.reshape(Bt, s_pad, H)

        # ---- Linear(H->1) score projection ----------------------------------
        # H is tiny: a VPU multiply + lane reduce beats an N=1 MXU matmul.
        # b2 is dropped (softmax over S is shift-invariant).
        s = jnp.sum(h * w2_ref[...], axis=-1)             # (Bt, S_pad) f32

        # Mask any sequence padding so it gets exactly zero softmax weight.
        if s_pad != s_actual:
            col = jax.lax.broadcasted_iota(jnp.int32, (Bt, s_pad), 1)
            s = jnp.where(col < s_actual, s, -jnp.inf)

        # ---- Numerically stable softmax over the sequence axis --------------
        m = jnp.max(s, axis=-1, keepdims=True)            # (Bt, 1)
        e = jnp.exp(s - m)                                 # (Bt, S_pad)
        l = jnp.sum(e, axis=-1, keepdims=True)             # (Bt, 1)

        # ---- Weighted sum over S as a batched MXU contraction ----------------
        # (Bt,1,S_pad) @ (Bt,S_pad,F) -> (Bt,1,F).  When streaming bf16, the
        # softmax weights are quantized to bf16 for the matmul (documented
        # tolerance in the wrapper); accumulation stays f32.
        num = jnp.einsum(
            "bqs,bsf->bqf",
            e[:, None, :].astype(x.dtype),
            x,
            preferred_element_type=jnp.float32,
        )[:, 0, :]                                         # (Bt, F) f32

        # Exact normalization (l is only Bt scalars; approx reciprocal buys
        # nothing here and cost accuracy).
        o_ref[...] = (num / l).astype(o_ref.dtype)

    return kernel


# ---------------------------------------------------------------------------
# Generation-aware sizing helpers
# ---------------------------------------------------------------------------
def _tpu_caps():
    """(vmem_limit_bytes, has_two_tensorcores) — safe fallbacks everywhere."""
    vmem_cap = 64 << 20                    # conservative floor (v7x per-TC VMEM)
    try:
        vmem_cap = int(pltpu.get_tpu_info().vmem_capacity_bytes)
    except Exception:
        pass
    two_tc = False
    try:
        two_tc = "v7" in jax.devices()[0].device_kind.lower()
    except Exception:
        pass
    # ~96 MiB on v5e/v6e (128 MiB physical), ~48 MiB on v7x (64 MiB physical).
    vmem_limit = min((vmem_cap * 3) // 4, 96 << 20)
    return vmem_limit, two_tc


def _pick_batch_tile(B, per_row_bytes, budget_bytes, two_tc):
    """Return (B_pad, Bt): Bt divides B_pad; Bt % 8 == 0 or Bt == B_pad."""
    max_bt = max(1, budget_bytes // max(per_row_bytes, 1))
    if B <= max_bt:
        # Whole batch fits in one block -> Bt == full dim (alignment rule OK).
        if two_tc and B >= 16 and B % 16 == 0:
            return B, B // 2              # 2 even steps so both v7x TCs get work
        return B, B
    # Must tile: biggest multiple-of-8 tile that fits the budget, pad B up.
    bt = max(8, (max_bt // 8) * 8)
    steps = -(-B // bt)
    if two_tc and steps % 2:
        steps += 1                        # even step count -> balanced TC split
    return bt * steps, bt


# ---------------------------------------------------------------------------
# Wrapper
# ---------------------------------------------------------------------------
def attention_module(x, w1, b1, w2, b2=None, *, stream_dtype=None):
    """x: (B, S, F). w1: (F, H), b1: (H,), w2: (H, 1). b2 unused (softmax is
    shift-invariant).  stream_dtype=jnp.bfloat16 halves HBM traffic for x/W1
    (accumulation stays f32; expect ~bf16-level output error).  Returns
    (B, F) float32."""
    B, S, F = x.shape
    H = w1.shape[1]
    del b2

    if stream_dtype is not None:
        x = x.astype(stream_dtype)
        w1 = w1.astype(stream_dtype)
    b1 = b1.astype(jnp.float32)
    w2 = w2.astype(jnp.float32)

    x_item = jnp.dtype(x.dtype).itemsize
    sublane = 8 if x_item >= 4 else (16 if x_item == 2 else 32)
    s_pad = ((S + sublane - 1) // sublane) * sublane

    vmem_limit, two_tc = _tpu_caps()
    # Per-batch-row working set (bytes), consistent with vmem_limit:
    per_row = (
        2 * s_pad * F * x_item            # double-buffered x block
        + 2 * s_pad * H * 4               # f32 h (+ pre-tanh temp headroom)
        + 3 * s_pad * 4                   # scores / e / mask temps
        + 3 * F * 4                       # num + double-buffered out block
    )
    fixed = 2 * F * H * x_item + 4 * H * 4 + (64 << 10)   # weights + slack
    budget = int(0.8 * (vmem_limit - fixed))
    b_pad, bt = _pick_batch_tile(B, per_row, budget, two_tc)

    if s_pad != S or b_pad != B:
        # Alignment/tiling pad only when needed (jnp.pad is an extra HBM pass).
        x = jnp.pad(x, ((0, b_pad - B), (0, s_pad - S), (0, 0)))

    b1_2d = b1.reshape(1, H)
    w2_3d = w2.reshape(1, 1, H)

    out = pl.pallas_call(
        _make_attention_kernel(S, s_pad),
        out_shape=jax.ShapeDtypeStruct((b_pad, F), jnp.float32),
        grid_spec=pltpu.PrefetchScalarGridSpec(
            num_scalar_prefetch=0,
            grid=(b_pad // bt,),
            in_specs=[
                pl.BlockSpec((bt, s_pad, F), lambda i: (i, 0, 0)),  # x block
                pl.BlockSpec((F, H), lambda i: (0, 0)),             # W1 (resident)
                pl.BlockSpec((1, H), lambda i: (0, 0)),             # b1
                pl.BlockSpec((1, 1, H), lambda i: (0, 0, 0)),       # W2 as a row
            ],
            out_specs=pl.BlockSpec((bt, F), lambda i: (i, 0)),
        ),
        compiler_params=pltpu.CompilerParams(
            dimension_semantics=("parallel",),
            vmem_limit_bytes=vmem_limit,
        ),
    )(x, w1, b1_2d, w2_3d)

    return out[:B] if b_pad != B else out


def attention_module_ref(x, w1, b1, w2, b2):
    """Pure-JAX reference matching the PyTorch forward."""
    h = jnp.tanh(x @ w1 + b1)            # (B, S, H)
    s = h @ w2 + b2                      # (B, S, 1)
    w = jax.nn.softmax(s, axis=1)        # softmax over seq (dim=1)
    return jnp.sum(x * w, axis=1)        # (B, F)


if __name__ == "__main__":
    B, S, F, H = 4, 8, 32, 16  # batch, seq, in_features, out_features

    key = jax.random.PRNGKey(0)
    kx, kw1, kb1, kw2, kb2 = jax.random.split(key, 5)

    x = jax.random.normal(kx, (B, S, F), dtype=jnp.float32)
    # Deterministic parameter init (synthetic weights, not a checkpoint).
    w1 = jax.random.normal(kw1, (F, H), dtype=jnp.float32) * 0.1
    b1 = jax.random.normal(kb1, (H,), dtype=jnp.float32) * 0.1
    w2 = jax.random.normal(kw2, (H, 1), dtype=jnp.float32) * 0.1
    b2 = jax.random.normal(kb2, (1,), dtype=jnp.float32) * 0.1

    ref = attention_module_ref(x, w1, b1, w2, b2)

    # Default (f32) path: exact normalization -> tight tolerance.
    out = jax.block_until_ready(attention_module(x, w1, b1, w2, b2))
    assert out.shape == (B, F), out.shape
    err = float(jnp.max(jnp.abs(out - ref)))
    assert jnp.allclose(out, ref, atol=1e-4, rtol=1e-4), f"f32 mismatch: {err}"

    # bf16-streaming path (halves HBM bytes; exercises S-pad + mask path too).
    out_bf16 = jax.block_until_ready(
        attention_module(x, w1, b1, w2, b2, stream_dtype=jnp.bfloat16)
    )
    err_bf16 = float(jnp.max(jnp.abs(out_bf16 - ref)))
    assert jnp.allclose(out_bf16, ref, atol=5e-2, rtol=5e-2), (
        f"bf16 mismatch: {err_bf16}"
    )

    print("KERNEL_OK")
</pallas_src>

<mosaic_0001>
module attributes {stable_mosaic.version = 11 : i64} {
  func.func @kernel(%arg0: i32, %arg1: memref<4x8x32xf32, #tpu.memory_space<vmem>>, %arg2: memref<32x16xf32, #tpu.memory_space<vmem>>, %arg3: memref<1x16xf32, #tpu.memory_space<vmem>>, %arg4: memref<1x1x16xf32, #tpu.memory_space<vmem>>, %arg5: memref<4x32xf32, #tpu.memory_space<vmem>>) attributes {dimension_semantics = [#tpu.dimension_semantics<parallel>], iteration_bounds = array<i64: 1>, scalar_prefetch = 0 : i64, scratch_operands = 0 : i64, tpu.core_type = #tpu.core_type<tc>, window_params = [{transform_indices = @transform_0, window_bounds = array<i64: 4, 8, 32>}, {pipeline_mode = #tpu.pipeline_mode<synchronous>, transform_indices = @transform_1, window_bounds = array<i64: 32, 16>}, {pipeline_mode = #tpu.pipeline_mode<synchronous>, transform_indices = @transform_2, window_bounds = array<i64: 1, 16>}, {pipeline_mode = #tpu.pipeline_mode<synchronous>, transform_indices = @transform_3, window_bounds = array<i64: 1, 1, 16>}, {transform_indices = @transform_4, window_bounds = array<i64: 4, 32>}]} {
    %c0 = arith.constant 0 : index
    %c0_0 = arith.constant 0 : index
    %c0_1 = arith.constant 0 : index
    %0 = vector.load %arg1[%c0, %c0_0, %c0_1] : memref<4x8x32xf32, #tpu.memory_space<vmem>>, vector<4x8x32xf32>
    %1 = vector.shape_cast %0 : vector<4x8x32xf32> to vector<32x32xf32>
    %c0_2 = arith.constant 0 : index
    %c0_3 = arith.constant 0 : index
    %2 = vector.load %arg2[%c0_2, %c0_3] : memref<32x16xf32, #tpu.memory_space<vmem>>, vector<32x16xf32>
    %cst = arith.constant dense<0.000000e+00> : vector<32x16xf32>
    %3 = tpu.matmul %1, %2, %cst {dimension_numbers = #tpu.dot_dimension_numbers<[1], [0], [0], [1], [0, 0, 1, 1], [], []>} : vector<32x32xf32>, vector<32x16xf32>, vector<32x16xf32> -> vector<32x16xf32>
    %c0_4 = arith.constant 0 : index
    %c0_5 = arith.constant 0 : index
    %4 = vector.load %arg3[%c0_4, %c0_5] : memref<1x16xf32, #tpu.memory_space<vmem>>, vector<1x16xf32>
    %5 = vector.broadcast %4 : vector<1x16xf32> to vector<32x16xf32>
    %6 = arith.addf %3, %5 : vector<32x16xf32>
    %7 = math.tanh %6 : vector<32x16xf32>
    %8 = vector.shape_cast %7 : vector<32x16xf32> to vector<4x8x16xf32>
    %c0_6 = arith.constant 0 : index
    %c0_7 = arith.constant 0 : index
    %c0_8 = arith.constant 0 : index
    %9 = vector.load %arg4[%c0_6, %c0_7, %c0_8] : memref<1x1x16xf32, #tpu.memory_space<vmem>>, vector<1x1x16xf32>
    %10 = vector.broadcast %9 : vector<1x1x16xf32> to vector<4x8x16xf32>
    %11 = arith.mulf %8, %10 : vector<4x8x16xf32>
    %cst_9 = arith.constant dense<0.000000e+00> : vector<4x8xf32>
    %12 = vector.multi_reduction <add>, %11, %cst_9 [2] : vector<4x8x16xf32> to vector<4x8xf32>
    %cst_10 = arith.constant dense<0xFF800000> : vector<4xf32>
    %13 = vector.multi_reduction <maximumf>, %12, %cst_10 [1] : vector<4x8xf32> to vector<4xf32>
    %14 = vector.shape_cast %13 : vector<4xf32> to vector<4x1xf32>
    %15 = vector.broadcast %14 : vector<4x1xf32> to vector<4x8xf32>
    %16 = arith.subf %12, %15 : vector<4x8xf32>
    %17 = math.exp %16 : vector<4x8xf32>
    %cst_11 = arith.constant dense<0.000000e+00> : vector<4xf32>
    %18 = vector.multi_reduction <add>, %17, %cst_11 [1] : vector<4x8xf32> to vector<4xf32>
    %19 = vector.shape_cast %18 : vector<4xf32> to vector<4x1xf32>
    %20 = vector.shape_cast %17 : vector<4x8xf32> to vector<4x1x8xf32>
    "tpu.trace_start"() <{level = 10 : i32, message = "bqs,bsf->bqf"}> : () -> ()
    %cst_12 = arith.constant dense<0.000000e+00> : vector<4x1x32xf32>
    %21 = tpu.matmul %20, %0, %cst_12 {dimension_numbers = #tpu.dot_dimension_numbers<[2], [1], [1], [2], [0, 0, 0, 1, 1, 2], [0], [0]>} : vector<4x1x8xf32>, vector<4x8x32xf32>, vector<4x1x32xf32> -> vector<4x1x32xf32>
    "tpu.trace_stop"() : () -> ()
    %22 = vector.shape_cast %21 : vector<4x1x32xf32> to vector<4x32xf32>
    %23 = vector.broadcast %19 : vector<4x1xf32> to vector<4x32xf32>
    %24 = arith.divf %22, %23 : vector<4x32xf32>
    %c0_13 = arith.constant 0 : index
    %c0_14 = arith.constant 0 : index
    %25 = vector.load %arg5[%c0_13, %c0_14] : memref<4x32xf32, #tpu.memory_space<vmem>>, vector<4x32xf32>
    tpu.vector_store %arg5[%c0_13, %c0_14], %24 {strides = array<i32>} : memref<4x32xf32, #tpu.memory_space<vmem>>, vector<4x32xf32>,
    return
  }
  func.func @transform_0(%arg0: i32) -> (i32, i32, i32) {
    %c0_i32 = arith.constant 0 : i32
    %c0_i32_0 = arith.constant 0 : i32
    %c0_i32_1 = arith.constant 0 : i32
    return %arg0, %c0_i32, %c0_i32_0 : i32, i32, i32
  }
  func.func @transform_1(%arg0: i32) -> (i32, i32) {
    %c0_i32 = arith.constant 0 : i32
    %c0_i32_0 = arith.constant 0 : i32
    %c0_i32_1 = arith.constant 0 : i32
    return %c0_i32, %c0_i32_0 : i32, i32
  }
  func.func @transform_2(%arg0: i32) -> (i32, i32) {
    %c0_i32 = arith.constant 0 : i32
    %c0_i32_0 = arith.constant 0 : i32
    %c0_i32_1 = arith.constant 0 : i32
    return %c0_i32, %c0_i32_0 : i32, i32
  }
  func.func @transform_3(%arg0: i32) -> (i32, i32, i32) {
    %c0_i32 = arith.constant 0 : i32
    %c0_i32_0 = arith.constant 0 : i32
    %c0_i32_1 = arith.constant 0 : i32
    %c0_i32_2 = arith.constant 0 : i32
    return %c0_i32, %c0_i32_0, %c0_i32_1 : i32, i32, i32
  }
  func.func @transform_4(%arg0: i32) -> (i32, i32) {
    %c0_i32 = arith.constant 0 : i32
    %c0_i32_0 = arith.constant 0 : i32
    return %arg0, %c0_i32 : i32, i32
  }
}

</mosaic_0001>

<llo_original>
// kernel: tpu_custom_call.1
$region0: #{tpu_custom_call.1}
  #allocation0 [shape = 'u32[]', space=smem, size = 0x4, offset = 0x4, fixed_abs, tag = 'smem constant byte address 0x4 - core index']
  #allocation1 [shape = 'u32[144,128]{1,0:T(1,128)}', space=vmem, size = 0x12000, scoped, tag = 'internal scratch']
  %s0 = inlined_call_operand.vmem [shape: f32[4,8,32], index: 0, kind: input, shape index: {}]
  %s1 = inlined_call_operand.vmem [shape: f32[32,16], index: 1, kind: input, shape index: {}]
  %s2 = inlined_call_operand.vmem [shape: f32[1,16], index: 2, kind: input, shape index: {}]
  %s3 = inlined_call_operand.vmem [shape: f32[1,1,16], index: 3, kind: input, shape index: {}]
  %s4 = inlined_call_operand.hbm [shape: f32[4,32], index: 4, kind: output, shape index: {}]
  %s5 = sld [smem:[#allocation0]]
  $region26: #{tpu_custom_call.1} parent=0
    _
  %s7 = ssub.s32 1, %s5
  %s8 = scalar_select 0, %s7, %s5
  $region1: #{tpu_custom_call.1} parent=0
    #allocation2 [shape = 'u8[2048]{0}', space=vmem, size = 0x800, scoped, tag = 'output window, operand 0, single buffered']
    #allocation3 [shape = 's32[1]{0}', space=sflag, size = 0x4, scoped, tag = 'scoped memory for tpu_custom_call.1']
    %9 = vsyncpa [#allocation3], 0
    // Predicated region
    $region2: #{tpu_custom_call.1} parent=1 // pred_check
      _
    $region3: #{tpu_custom_call.1} parent=1 // pred_check_branch
      %11 = sbr.rel (0) target = $region5
    $region4: #{tpu_custom_call.1} parent=1 // pred_region
      _
    $region5: #{tpu_custom_call.1} parent=1 // pred_fallthru
      _
    // Predicated region
    $region6: #{tpu_custom_call.1} parent=1 // pred_check
      _
    $region7: #{tpu_custom_call.1} parent=1 // pred_check_branch
      %13 = sbr.rel (0) target = $region9
    $region8: #{tpu_custom_call.1} parent=1 // pred_region
      _
    $region9: #{tpu_custom_call.1} parent=1 // pred_fallthru
      _
    // Predicated region
    $region10: #{tpu_custom_call.1} parent=1 // pred_check
      _
    $region11: #{tpu_custom_call.1} parent=1 // pred_check_branch
      %15 = sbr.rel (0) target = $region13
    $region12: #{tpu_custom_call.1} parent=1 // pred_region
      _
    $region13: #{tpu_custom_call.1} parent=1 // pred_fallthru
      _
    // Predicated region
    $region14: #{tpu_custom_call.1} parent=1 // pred_check
      _
    $region15: #{tpu_custom_call.1} parent=1 // pred_check_branch
      %17 = sbr.rel (0) target = $region17
    $region16: #{tpu_custom_call.1} parent=1 // pred_region
      _
    $region17: #{tpu_custom_call.1} parent=1 // pred_fallthru
      _
    %v18 = vld [vmem:[%s0] sm:$0xff]
    %v19 = vld [vmem:[%s0 + $0x8] sm:$0xff]
    %v20 = vld [vmem:[%s0 + $0x10] sm:$0xff]
    %v21 = vld [vmem:[%s0 + $0x18] sm:$0xff]
    %v22 = vld [vmem:[%s1] sm:$0xff]
    %v23 = vld [vmem:[%s1 + $0x8] sm:$0xff]
    %v24 = vld [vmem:[%s1 + $0x10] sm:$0xff]
    %v25 = vld [vmem:[%s1 + $0x18] sm:$0xff]
    %v26 = vld [vmem:[%s2] sm:$0x1]
    %v28 = vlaneseq
    %v29 = vshrl.u32 %v28, 7
    %v30 = vsub.s32 0, %v29
    %v31 = vrot.slane %v26, %v30
    %vm33 = vcmask 261120
    %v35 = vsel %vm33, %v18, 0
    %v38 = vsel %vm33, %v19, 0
    %v41 = vsel %vm33, %v20, 0
    %v44 = vsel %vm33, %v21, 0
    %46 = vmatprep.subr.mxu0 0.0
    %47 = vmatpush1.msra.mxu0 0.0
    %48 = vmatprep.subr.mxu0 0.0
    %49 = vmatpush1.msra.mxu0 0.0
    %50 = vmatprep.subr.mxu0 0.0
    %51 = vmatpush1.msra.mxu0 0.0
    %52 = vmatprep.subr.mxu0 0.0
    %53 = vmatpush1.msra.mxu0 0.0
    %54 = vmatprep.subr.mxu0 0.0
    %55 = vmatpush1.msra.mxu0 0.0
    %56 = vmatprep.subr.mxu0 0.0
    %57 = vmatpush1.msra.mxu0 0.0
    %58 = vmatprep.subr.mxu0 0.0
    %59 = vmatpush1.msra.mxu0 0.0
    %60 = vmatprep.subr.mxu0 0.0
    %61 = vmatpush1.msra.mxu0 0.0
    %62 = vmatprep.subr.mxu0 0.0
    %63 = vmatpush1.msra.mxu0 0.0
    %64 = vmatprep.subr.mxu0 0.0
    %65 = vmatpush1.msra.mxu0 0.0
    %66 = vmatprep.subr.mxu0 0.0
    %67 = vmatpush1.msra.mxu0 0.0
    %68 = vmatprep.subr.mxu0 0.0
    %69 = vmatpush1.msra.mxu0 0.0
    %70 = vmatprep.subr.mxu0 0.0
    %71 = vmatpush1.msra.mxu0 %v25
    %72 = vmatprep.subr.mxu0 0.0
    %73 = vmatpush1.msra.mxu0 %v24
    %74 = vmatprep.subr.mxu0 0.0
    %75 = vmatpush1.msra.mxu0 %v23
    %76 = vmatprep.subr.mxu0 0.0
    %77 = vmatpush1.msra.mxu0 %v22
    %78 = vmatprep.subr.mxu0 0.0
    %79 = vmatpush2.msra.mxu0 0.0
    %80 = vmatprep.subr.mxu0 0.0
    %81 = vmatpush2.msra.mxu0 0.0
    %82 = vmatprep.subr.mxu0 0.0
    %83 = vmatpush2.msra.mxu0 0.0
    %84 = vmatprep.subr.mxu0 0.0
    %85 = vmatpush2.msra.mxu0 0.0
    %86 = vmatprep.subr.mxu0 0.0
    %87 = vmatpush2.msra.mxu0 0.0
    %88 = vmatprep.subr.mxu0 0.0
    %89 = vmatpush2.msra.mxu0 0.0
    %90 = vmatprep.subr.mxu0 0.0
    %91 = vmatpush2.msra.mxu0 0.0
    %92 = vmatprep.subr.mxu0 0.0
    %93 = vmatpush2.msra.mxu0 0.0
    %94 = vmatprep.subr.mxu0 0.0
    %95 = vmatpush2.msra.mxu0 0.0
    %96 = vmatprep.subr.mxu0 0.0
    %97 = vmatpush2.msra.mxu0 0.0
    %98 = vmatprep.subr.mxu0 0.0
    %99 = vmatpush2.msra.mxu0 0.0
    %100 = vmatprep.subr.mxu0 0.0
    %101 = vmatpush2.msra.mxu0 0.0
    %102 = vmatprep.subr.mxu0 0.0
    %103 = vmatpush2.msra.mxu0 0.0
    %104 = vmatprep.subr.mxu0 0.0
    %105 = vmatpush2.msra.mxu0 0.0
    %106 = vmatprep.subr.mxu0 0.0
    %107 = vmatpush2.msra.mxu0 0.0
    %108 = vmatprep.subr.mxu0 0.0
    %109 = vmatpush2.msra.mxu0 0.0
    %110 = vmatprep.mubr.f32.mxu0 0.0
    %111 = vmatmul.mubr.f32.gmra.mxu0 %v35
    %v112 = vpop.f32.mrf.mxu0
    %v113 = vadd.f32 %v31, %v112
    %v114 = vpop.f32.mrf.mxu0
    %115 = vmatprep.mubr.f32.mxu0 0.0
    %116 = vmatmul.mubr.f32.gmra.mxu0 %v38
    %v117 = vpop.f32.mrf.mxu0
    %v118 = vadd.f32 %v31, %v117
    %v119 = vpop.f32.mrf.mxu0
    %120 = vmatprep.mubr.f32.mxu0 0.0
    %121 = vmatmul.mubr.f32.gmra.mxu0 %v41
    %v122 = vpop.f32.mrf.mxu0
    %v123 = vadd.f32 %v31, %v122
    %v124 = vpop.f32.mrf.mxu0
    %125 = vmatprep.mubr.f32.mxu0 0.0
    %126 = vmatmul.mubr.f32.gmra.mxu0 %v44
    %v127 = vpop.f32.mrf.mxu0
    %v128 = vadd.f32 %v31, %v127
    %v129 = vpop.f32.mrf.mxu0
    %130 = vdwg.mxu0
    %v131 = vtanh.pop %v113
    %v132 = vtanh.pop %v118
    %v133 = vtanh.pop %v123
    %v134 = vtanh.pop %v128
    %v135 = vld [vmem:[%s3] sm:$0x1]
    %v137 = vlaneseq
    %v138 = vshrl.u32 %v137, 7
    %v139 = vsub.s32 0, %v138
    %v140 = vrot.slane %v135, %v139
    %v142 = vmul.f32 %v131, %v140
    %v143 = vmul.f32 %v132, %v140
    %v144 = vmul.f32 %v133, %v140
    %v145 = vmul.f32 %v134, %v140
    %vm146 = vcmask 130048
    %v147 = vsel %vm146, %v142, 0.0
    %148 = vadd.xlane.f32.xlu0 %v147
    %v149 = vpop.xlane.xlu0 %148
    %v150 = vsel %vm146, %v143, 0.0
    %151 = vadd.xlane.f32.xlu0 %v150
    %v152 = vpop.xlane.xlu0 %151
    %v153 = vsel %vm146, %v144, 0.0
    %154 = vadd.xlane.f32.xlu0 %v153
    %v155 = vpop.xlane.xlu0 %154
    %v156 = vsel %vm146, %v145, 0.0
    %157 = vadd.xlane.f32.xlu0 %v156
    %v158 = vpop.xlane.xlu0 %157
    %v163 = vlaneseq
    %v164 = vand.u32 %v163, 127
    %v165 = vlaneseq
    %v166 = vshrl.u32 %v165, 7
    %v167 = vsub.s32 %v164, %v166
    %v168 = vrot.slane %v149, %v167
    %v169 = vlaneseq
    %v170 = vshrl.u32 %v169, 7
    %v171 = vsub.s32 %v164, %v170
    %v172 = vrot.slane %v152, %v171
    %v173 = vlaneseq
    %v174 = vshrl.u32 %v173, 7
    %v175 = vsub.s32 %v164, %v174
    %v176 = vrot.slane %v155, %v175
    %v177 = vlaneseq
    %v178 = vshrl.u32 %v177, 7
    %v179 = vsub.s32 %v164, %v178
    %v180 = vrot.slane %v158, %v179
    %vm181 = vcmask 1041409
    %v182 = vsel %vm181, %v172, %v168
    %vm183 = vcmask 1042434
    %v184 = vsel %vm183, %v176, %v182
    %vm185 = vcmask 1043459
    %v186 = vsel %vm185, %v180, %v184
    %vm188 = vcmask 60416
    %v189 = vsel %vm188, %v186, -inf
    %190 = vmax.xlane.f32.xlu0 %v189
    %v191 = vpop.xlane.xlu0 %190
    %v193 = vlaneseq
    %v194 = vshrl.u32 %v193, 7
    %v195 = vsub.s32 0, %v194
    %v196 = vrot.slane %v191, %v195
    %v197 = vlaneseq
    %v198 = vshrl.u32 %v197, 7
    %v199 = vsub.s32 1, %v198
    %v200 = vrot.slane %v191, %v199
    %v201 = vlaneseq
    %v202 = vshrl.u32 %v201, 7
    %v203 = vsub.s32 2, %v202
    %v204 = vrot.slane %v191, %v203
    %v205 = vlaneseq
    %v206 = vshrl.u32 %v205, 7
    %v207 = vsub.s32 3, %v206
    %v208 = vrot.slane %v191, %v207
    %v213 = vsub.f32 %v149, %v196
    %v214 = vsub.f32 %v152, %v200
    %v215 = vsub.f32 %v155, %v204
    %v216 = vsub.f32 %v158, %v208
    %v217 = vmul.f32 %v213, 1.442695
    %v218 = vpow.pop %v217
    %v219 = vmul.f32 %v214, 1.442695
    %v220 = vpow.pop %v219
    %v221 = vmul.f32 %v215, 1.442695
    %v222 = vpow.pop %v221
    %v223 = vmul.f32 %v216, 1.442695
    %v224 = vpow.pop %v223
    %229 = vset.pattern.permute.xlu0 0
    %230 = vperm.xlu0 %229, %v218
    %v231 = vpop.permute.xlu0 %230
    %232 = vset.pattern.permute.xlu0 0
    %233 = vperm.xlu0 %232, %v220
    %v234 = vpop.permute.xlu0 %233
    %235 = vset.pattern.permute.xlu0 0
    %236 = vperm.xlu0 %235, %v222
    %v237 = vpop.permute.xlu0 %236
    %238 = vset.pattern.permute.xlu0 0
    %239 = vperm.xlu0 %238, %v224
    %v240 = vpop.permute.xlu0 %239
    %v241 = vlaneseq
    %v242 = vshrl.u32 %v241, 7
    %v243 = vsub.s32 %v164, %v242
    %v244 = vrot.slane %v231, %v243
    %v245 = vlaneseq
    %v246 = vshrl.u32 %v245, 7
    %v247 = vsub.s32 %v164, %v246
    %v248 = vrot.slane %v234, %v247
    %v249 = vlaneseq
    %v250 = vshrl.u32 %v249, 7
    %v251 = vsub.s32 %v164, %v250
    %v252 = vrot.slane %v237, %v251
    %v253 = vlaneseq
    %v254 = vshrl.u32 %v253, 7
    %v255 = vsub.s32 %v164, %v254
    %v256 = vrot.slane %v240, %v255
    %v257 = vsel %vm181, %v248, %v244
    %v258 = vsel %vm183, %v252, %v257
    %v259 = vsel %vm185, %v256, %v258
    %v261 = vsel %vm188, %v259, 0.0
    %262 = vadd.xlane.f32.xlu0 %v261
    %v263 = vpop.xlane.xlu0 %262
    %vm264 = vcmask 64512
    %v265 = vsel %vm264, %v244, 0
    %267 = vmatprep.subr.mxu0 0.0
    %268 = vmatpush1.msra.mxu0 0.0
    %269 = vmatprep.subr.mxu0 0.0
    %270 = vmatpush1.msra.mxu0 0.0
    %271 = vmatprep.subr.mxu0 0.0
    %272 = vmatpush1.msra.mxu0 0.0
    %273 = vmatprep.subr.mxu0 0.0
    %274 = vmatpush1.msra.mxu0 0.0
    %275 = vmatprep.subr.mxu0 0.0
    %276 = vmatpush1.msra.mxu0 0.0
    %277 = vmatprep.subr.mxu0 0.0
    %278 = vmatpush1.msra.mxu0 0.0
    %279 = vmatprep.subr.mxu0 0.0
    %280 = vmatpush1.msra.mxu0 0.0
    %281 = vmatprep.subr.mxu0 0.0
    %282 = vmatpush1.msra.mxu0 0.0
    %283 = vmatprep.subr.mxu0 0.0
    %284 = vmatpush1.msra.mxu0 0.0
    %285 = vmatprep.subr.mxu0 0.0
    %286 = vmatpush1.msra.mxu0 0.0
    %287 = vmatprep.subr.mxu0 0.0
    %288 = vmatpush1.msra.mxu0 0.0
    %289 = vmatprep.subr.mxu0 0.0
    %290 = vmatpush1.msra.mxu0 0.0
    %291 = vmatprep.subr.mxu0 0.0
    %292 = vmatpush1.msra.mxu0 0.0
    %293 = vmatprep.subr.mxu0 0.0
    %294 = vmatpush1.msra.mxu0 0.0
    %295 = vmatprep.subr.mxu0 0.0
    %296 = vmatpush1.msra.mxu0 0.0
    %297 = vmatprep.subr.mxu0 0.0
    %298 = vmatpush1.msra.mxu0 %v18
    %299 = vmatprep.subr.mxu0 0.0
    %300 = vmatpush2.msra.mxu0 0.0
    %301 = vmatprep.subr.mxu0 0.0
    %302 = vmatpush2.msra.mxu0 0.0
    %303 = vmatprep.subr.mxu0 0.0
    %304 = vmatpush2.msra.mxu0 0.0
    %305 = vmatprep.subr.mxu0 0.0
    %306 = vmatpush2.msra.mxu0 0.0
    %307 = vmatprep.subr.mxu0 0.0
    %308 = vmatpush2.msra.mxu0 0.0
    %309 = vmatprep.subr.mxu0 0.0
    %310 = vmatpush2.msra.mxu0 0.0
    %311 = vmatprep.subr.mxu0 0.0
    %312 = vmatpush2.msra.mxu0 0.0
    %313 = vmatprep.subr.mxu0 0.0
    %314 = vmatpush2.msra.mxu0 0.0
    %315 = vmatprep.subr.mxu0 0.0
    %316 = vmatpush2.msra.mxu0 0.0
    %317 = vmatprep.subr.mxu0 0.0
    %318 = vmatpush2.msra.mxu0 0.0
    %319 = vmatprep.subr.mxu0 0.0
    %320 = vmatpush2.msra.mxu0 0.0
    %321 = vmatprep.subr.mxu0 0.0
    %322 = vmatpush2.msra.mxu0 0.0
    %323 = vmatprep.subr.mxu0 0.0
    %324 = vmatpush2.msra.mxu0 0.0
    %325 = vmatprep.subr.mxu0 0.0
    %326 = vmatpush2.msra.mxu0 0.0
    %327 = vmatprep.subr.mxu0 0.0
    %328 = vmatpush2.msra.mxu0 0.0
    %329 = vmatprep.subr.mxu0 0.0
    %330 = vmatpush2.msra.mxu0 0.0
    %331 = vmatprep.mubr.f32.mxu0 0.0
    %332 = vmatmul.mubr.f32.gmra.mxu0 %v265
    %v333 = vpop.f32.mrf.mxu0
    %v334 = vadd.f32 0.0, %v333
    %v335 = vpop.f32.mrf.mxu0
    %336 = vdwg.mxu0
    %v337 = vsel %vm264, %v248, 0
    %339 = vmatprep.subr.mxu0 0.0
    %340 = vmatpush1.msra.mxu0 0.0
    %341 = vmatprep.subr.mxu0 0.0
    %342 = vmatpush1.msra.mxu0 0.0
    %343 = vmatprep.subr.mxu0 0.0
    %344 = vmatpush1.msra.mxu0 0.0
    %345 = vmatprep.subr.mxu0 0.0
    %346 = vmatpush1.msra.mxu0 0.0
    %347 = vmatprep.subr.mxu0 0.0
    %348 = vmatpush1.msra.mxu0 0.0
    %349 = vmatprep.subr.mxu0 0.0
    %350 = vmatpush1.msra.mxu0 0.0
    %351 = vmatprep.subr.mxu0 0.0
    %352 = vmatpush1.msra.mxu0 0.0
    %353 = vmatprep.subr.mxu0 0.0
    %354 = vmatpush1.msra.mxu0 0.0
    %355 = vmatprep.subr.mxu0 0.0
    %356 = vmatpush1.msra.mxu0 0.0
    %357 = vmatprep.subr.mxu0 0.0
    %358 = vmatpush1.msra.mxu0 0.0
    %359 = vmatprep.subr.mxu0 0.0
    %360 = vmatpush1.msra.mxu0 0.0
    %361 = vmatprep.subr.mxu0 0.0
    %362 = vmatpush1.msra.mxu0 0.0
    %363 = vmatprep.subr.mxu0 0.0
    %364 = vmatpush1.msra.mxu0 0.0
    %365 = vmatprep.subr.mxu0 0.0
    %366 = vmatpush1.msra.mxu0 0.0
    %367 = vmatprep.subr.mxu0 0.0
    %368 = vmatpush1.msra.mxu0 0.0
    %369 = vmatprep.subr.mxu0 0.0
    %370 = vmatpush1.msra.mxu0 %v19
    %371 = vmatprep.subr.mxu0 0.0
    %372 = vmatpush2.msra.mxu0 0.0
    %373 = vmatprep.subr.mxu0 0.0
    %374 = vmatpush2.msra.mxu0 0.0
    %375 = vmatprep.subr.mxu0 0.0
    %376 = vmatpush2.msra.mxu0 0.0
    %377 = vmatprep.subr.mxu0 0.0
    %378 = vmatpush2.msra.mxu0 0.0
    %379 = vmatprep.subr.mxu0 0.0
    %380 = vmatpush2.msra.mxu0 0.0
    %381 = vmatprep.subr.mxu0 0.0
    %382 = vmatpush2.msra.mxu0 0.0
    %383 = vmatprep.subr.mxu0 0.0
    %384 = vmatpush2.msra.mxu0 0.0
    %385 = vmatprep.subr.mxu0 0.0
    %386 = vmatpush2.msra.mxu0 0.0
    %387 = vmatprep.subr.mxu0 0.0
    %388 = vmatpush2.msra.mxu0 0.0
    %389 = vmatprep.subr.mxu0 0.0
    %390 = vmatpush2.msra.mxu0 0.0
    %391 = vmatprep.subr.mxu0 0.0
    %392 = vmatpush2.msra.mxu0 0.0
    %393 = vmatprep.subr.mxu0 0.0
    %394 = vmatpush2.msra.mxu0 0.0
    %395 = vmatprep.subr.mxu0 0.0
    %396 = vmatpush2.msra.mxu0 0.0
    %397 = vmatprep.subr.mxu0 0.0
    %398 = vmatpush2.msra.mxu0 0.0
    %399 = vmatprep.subr.mxu0 0.0
    %400 = vmatpush2.msra.mxu0 0.0
    %401 = vmatprep.subr.mxu0 0.0
    %402 = vmatpush2.msra.mxu0 0.0
    %403 = vmatprep.mubr.f32.mxu0 0.0
    %404 = vmatmul.mubr.f32.gmra.mxu0 %v337
    %v405 = vpop.f32.mrf.mxu0
    %v406 = vadd.f32 0.0, %v405
    %v407 = vpop.f32.mrf.mxu0
    %408 = vdwg.mxu0
    %v409 = vsel %vm264, %v252, 0
    %411 = vmatprep.subr.mxu0 0.0
    %412 = vmatpush1.msra.mxu0 0.0
    %413 = vmatprep.subr.mxu0 0.0
    %414 = vmatpush1.msra.mxu0 0.0
    %415 = vmatprep.subr.mxu0 0.0
    %416 = vmatpush1.msra.mxu0 0.0
    %417 = vmatprep.subr.mxu0 0.0
    %418 = vmatpush1.msra.mxu0 0.0
    %419 = vmatprep.subr.mxu0 0.0
    %420 = vmatpush1.msra.mxu0 0.0
    %421 = vmatprep.subr.mxu0 0.0
    %422 = vmatpush1.msra.mxu0 0.0
    %423 = vmatprep.subr.mxu0 0.0
    %424 = vmatpush1.msra.mxu0 0.0
    %425 = vmatprep.subr.mxu0 0.0
    %426 = vmatpush1.msra.mxu0 0.0
    %427 = vmatprep.subr.mxu0 0.0
    %428 = vmatpush1.msra.mxu0 0.0
    %429 = vmatprep.subr.mxu0 0.0
    %430 = vmatpush1.msra.mxu0 0.0
    %431 = vmatprep.subr.mxu0 0.0
    %432 = vmatpush1.msra.mxu0 0.0
    %433 = vmatprep.subr.mxu0 0.0
    %434 = vmatpush1.msra.mxu0 0.0
    %435 = vmatprep.subr.mxu0 0.0
    %436 = vmatpush1.msra.mxu0 0.0
    %437 = vmatprep.subr.mxu0 0.0
    %438 = vmatpush1.msra.mxu0 0.0
    %439 = vmatprep.subr.mxu0 0.0
    %440 = vmatpush1.msra.mxu0 0.0
    %441 = vmatprep.subr.mxu0 0.0
    %442 = vmatpush1.msra.mxu0 %v20
    %443 = vmatprep.subr.mxu0 0.0
    %444 = vmatpush2.msra.mxu0 0.0
    %445 = vmatprep.subr.mxu0 0.0
    %446 = vmatpush2.msra.mxu0 0.0
    %447 = vmatprep.subr.mxu0 0.0
    %448 = vmatpush2.msra.mxu0 0.0
    %449 = vmatprep.subr.mxu0 0.0
    %450 = vmatpush2.msra.mxu0 0.0
    %451 = vmatprep.subr.mxu0 0.0
    %452 = vmatpush2.msra.mxu0 0.0
    %453 = vmatprep.subr.mxu0 0.0
    %454 = vmatpush2.msra.mxu0 0.0
    %455 = vmatprep.subr.mxu0 0.0
    %456 = vmatpush2.msra.mxu0 0.0
    %457 = vmatprep.subr.mxu0 0.0
    %458 = vmatpush2.msra.mxu0 0.0
    %459 = vmatprep.subr.mxu0 0.0
    %460 = vmatpush2.msra.mxu0 0.0
    %461 = vmatprep.subr.mxu0 0.0
    %462 = vmatpush2.msra.mxu0 0.0
    %463 = vmatprep.subr.mxu0 0.0
    %464 = vmatpush2.msra.mxu0 0.0
    %465 = vmatprep.subr.mxu0 0.0
    %466 = vmatpush2.msra.mxu0 0.0
    %467 = vmatprep.subr.mxu0 0.0
    %468 = vmatpush2.msra.mxu0 0.0
    %469 = vmatprep.subr.mxu0 0.0
    %470 = vmatpush2.msra.mxu0 0.0
    %471 = vmatprep.subr.mxu0 0.0
    %472 = vmatpush2.msra.mxu0 0.0
    %473 = vmatprep.subr.mxu0 0.0
    %474 = vmatpush2.msra.mxu0 0.0
    %475 = vmatprep.mubr.f32.mxu0 0.0
    %476 = vmatmul.mubr.f32.gmra.mxu0 %v409
    %v477 = vpop.f32.mrf.mxu0
    %v478 = vadd.f32 0.0, %v477
    %v479 = vpop.f32.mrf.mxu0
    %480 = vdwg.mxu0
    %v481 = vsel %vm264, %v256, 0
    %483 = vmatprep.subr.mxu0 0.0
    %484 = vmatpush1.msra.mxu0 0.0
    %485 = vmatprep.subr.mxu0 0.0
    %486 = vmatpush1.msra.mxu0 0.0
    %487 = vmatprep.subr.mxu0 0.0
    %488 = vmatpush1.msra.mxu0 0.0
    %489 = vmatprep.subr.mxu0 0.0
    %490 = vmatpush1.msra.mxu0 0.0
    %491 = vmatprep.subr.mxu0 0.0
    %492 = vmatpush1.msra.mxu0 0.0
    %493 = vmatprep.subr.mxu0 0.0
    %494 = vmatpush1.msra.mxu0 0.0
    %495 = vmatprep.subr.mxu0 0.0
    %496 = vmatpush1.msra.mxu0 0.0
    %497 = vmatprep.subr.mxu0 0.0
    %498 = vmatpush1.msra.mxu0 0.0
    %499 = vmatprep.subr.mxu0 0.0
    %500 = vmatpush1.msra.mxu0 0.0
    %501 = vmatprep.subr.mxu0 0.0
    %502 = vmatpush1.msra.mxu0 0.0
    %503 = vmatprep.subr.mxu0 0.0
    %504 = vmatpush1.msra.mxu0 0.0
    %505 = vmatprep.subr.mxu0 0.0
    %506 = vmatpush1.msra.mxu0 0.0
    %507 = vmatprep.subr.mxu0 0.0
    %508 = vmatpush1.msra.mxu0 0.0
    %509 = vmatprep.subr.mxu0 0.0
    %510 = vmatpush1.msra.mxu0 0.0
    %511 = vmatprep.subr.mxu0 0.0
    %512 = vmatpush1.msra.mxu0 0.0
    %513 = vmatprep.subr.mxu0 0.0
    %514 = vmatpush1.msra.mxu0 %v21
    %515 = vmatprep.subr.mxu0 0.0
    %516 = vmatpush2.msra.mxu0 0.0
    %517 = vmatprep.subr.mxu0 0.0
    %518 = vmatpush2.msra.mxu0 0.0
    %519 = vmatprep.subr.mxu0 0.0
    %520 = vmatpush2.msra.mxu0 0.0
    %521 = vmatprep.subr.mxu0 0.0
    %522 = vmatpush2.msra.mxu0 0.0
    %523 = vmatprep.subr.mxu0 0.0
    %524 = vmatpush2.msra.mxu0 0.0
    %525 = vmatprep.subr.mxu0 0.0
    %526 = vmatpush2.msra.mxu0 0.0
    %527 = vmatprep.subr.mxu0 0.0
    %528 = vmatpush2.msra.mxu0 0.0
    %529 = vmatprep.subr.mxu0 0.0
    %530 = vmatpush2.msra.mxu0 0.0
    %531 = vmatprep.subr.mxu0 0.0
    %532 = vmatpush2.msra.mxu0 0.0
    %533 = vmatprep.subr.mxu0 0.0
    %534 = vmatpush2.msra.mxu0 0.0
    %535 = vmatprep.subr.mxu0 0.0
    %536 = vmatpush2.msra.mxu0 0.0
    %537 = vmatprep.subr.mxu0 0.0
    %538 = vmatpush2.msra.mxu0 0.0
    %539 = vmatprep.subr.mxu0 0.0
    %540 = vmatpush2.msra.mxu0 0.0
    %541 = vmatprep.subr.mxu0 0.0
    %542 = vmatpush2.msra.mxu0 0.0
    %543 = vmatprep.subr.mxu0 0.0
    %544 = vmatpush2.msra.mxu0 0.0
    %545 = vmatprep.subr.mxu0 0.0
    %546 = vmatpush2.msra.mxu0 0.0
    %547 = vmatprep.mubr.f32.mxu0 0.0
    %548 = vmatmul.mubr.f32.gmra.mxu0 %v481
    %v549 = vpop.f32.mrf.mxu0
    %v550 = vadd.f32 0.0, %v549
    %v551 = vpop.f32.mrf.mxu0
    %552 = vdwg.mxu0
    %v554 = vrot.slane %v263, 1
    %v555 = vrot.slane %v263, 2
    %v556 = vrot.slane %v263, 3
    %v561 = vrcp.pop %v263
    %v562 = vmul.f32 %v334, %v561
    %v563 = vrcp.pop %v554
    %v564 = vmul.f32 %v406, %v563
    %v565 = vrcp.pop %v555
    %v566 = vmul.f32 %v478, %v565
    %v567 = vrcp.pop %v556
    %v568 = vmul.f32 %v550, %v567
    %v573 = vrot.slane %v564, 7
    %v574 = vsel %vm181, %v573, %v562
    %v575 = vrot.slane %v566, 6
    %v576 = vsel %vm183, %v575, %v574
    %v577 = vrot.slane %v568, 5
    %v578 = vsel %vm185, %v577, %v576
    %vm580 = vcmask 257024
    %581 = vst.msk [vmem:[#allocation2] sm:$0xf] %vm580, %v578
    // Predicated region
    $region18: #{tpu_custom_call.1} parent=1 // pred_check
      _
    $region19: #{tpu_custom_call.1} parent=1 // pred_check_branch
      %583 = sbr.rel (0) target = $region21
    $region20: #{tpu_custom_call.1} parent=1 // pred_region
      %s585 = ssub.s32 64, 64
      %586 = vsyncadd [#allocation3], %s585
      %s588 = sshll.u32 [#allocation2], 4
      %s589 = int_to_ptr.vmem [resolvable:$true] %s588
      %591 = dma.vmem_to_hbm [thread:$0]  %s589, 64, %s4, [#allocation3]
    $region21: #{tpu_custom_call.1} parent=1 // pred_fallthru
      _
    // Predicated region
    $region22: #{tpu_custom_call.1} parent=1 // pred_check
      _
    $region23: #{tpu_custom_call.1} parent=1 // pred_check_branch
      %593 = sbr.rel (0) target = $region25
    $region24: #{tpu_custom_call.1} parent=1 // pred_region
      %594 = dma.done [#allocation3], 64
    $region25: #{tpu_custom_call.1} parent=1 // pred_fallthru
      _
    %595 = vsyncpa [#allocation3], 1

</llo_original>
